<compile_context>
chip_gen: v7x
topology: tpu7x:2x2x1
jax: 0.10.0
libtpu: 0.0.40
codegen_flags: <defaults>
</compile_context>

<pallas_src>
import jax
import jax.numpy as jnp
from jax.experimental import pallas as pl
from jax.experimental.pallas import tpu as pltpu


def multirep_head_kernel(x_ref, wvu_ref, bvu_ref, watt_ref, wproj_ref, z_ref):
    bt, pz, fz = x_ref.shape
    fin = watt_ref.shape[-1]
    rl = wproj_ref.shape[-1] // 2

    x3 = x_ref[...]                                   # (bt, pz, fz) f32
    x2 = x3.reshape(bt * pz, fz)                      # flatten bags (sublane-major)

    mm_dtype = wvu_ref.dtype
    # Fused attention_V | attention_U projection: one MXU matmul, f32 accum,
    # one fused bias broadcast-add.
    h = (jnp.dot(x2.astype(mm_dtype), wvu_ref[...],
                 preferred_element_type=jnp.float32)
         + bvu_ref[...])                              # (bt*pz, 2*fin)
    v = jnp.tanh(h[:, :fin])
    u = jax.nn.sigmoid(h[:, fin:])
    gated = u * v                                     # (bt*pz, fin)

    # attention_weights (fin -> 1) as VPU multiply + XLU lane reduce
    # (no MXU round-trip for a single output lane). bw omitted: softmax is
    # shift-invariant, so it cancels exactly.
    prod3 = (gated * watt_ref[...]).reshape(bt, pz, fin)
    att = jnp.sum(prod3, axis=-1, keepdims=True)      # (bt, pz, 1)

    # Per-bag softmax over the patch axis (dim=1 of the original (bz, pz, 1)).
    m = jnp.max(att, axis=1, keepdims=True)
    e = jnp.exp(att - m)
    s = jnp.sum(e, axis=1, keepdims=True)
    w = e * pl.reciprocal(s, approx=False)            # (bt, pz, 1)

    # torch.bmm(weight, x).squeeze(1): VPU broadcast-multiply + sublane reduce.
    rep = jnp.sum(w * x3, axis=1)                     # (bt, fz) f32

    # projector | secondprojector fused into one bias-free matmul, f32 accum.
    proj = jnp.dot(rep.astype(mm_dtype), wproj_ref[...],
                   preferred_element_type=jnp.float32)  # (bt, 2*rl)
    p1 = proj[:, :rl]
    p2 = proj[:, rl:]

    # F.normalize(dim=1), eps=1e-12, reciprocal on the EUP.
    inv1 = pl.reciprocal(
        jnp.maximum(jnp.sqrt(jnp.sum(p1 * p1, axis=-1, keepdims=True)), 1e-12),
        approx=False)
    inv2 = pl.reciprocal(
        jnp.maximum(jnp.sqrt(jnp.sum(p2 * p2, axis=-1, keepdims=True)), 1e-12),
        approx=False)

    # Single lane-dense store: both normalized heads side by side.
    z_ref[...] = jnp.concatenate([p1 * inv1, p2 * inv2],
                                 axis=-1).astype(z_ref.dtype)


def multirep_head(x, wv, bv, wu, bu, ww, bw, wp1, wp2, *,
                  bag_tile=None, matmul_dtype=jnp.float32):
    """MultiRepNet forward from per-patch features.

    x: (bz, pz, fz) float32 per-patch features (output of featureExteract).
    Linear weights are stored transposed (in_features, out_features):
      wv, wu: (fz, fin); bv, bu: (1, fin); ww: (fin, 1); bw: (1, 1);
      wp1, wp2: (fz, rep)  (bias-free projectors).
    Returns (z1, z2), each (bz, rep), L2-normalized along dim=1.
    """
    bz, pz, fz = x.shape
    fin = wv.shape[1]
    rep = wp1.shape[1]
    del bw  # softmax over patches is shift-invariant -> bw cancels exactly.

    if bag_tile is None:
        bag_tile = bz            # collapse the grid: whole batch in one step
    assert bz % bag_tile == 0, "bag_tile must divide the batch size"
    # NOTE: for bag_tile < bz keep it a multiple of 8 (sublane tiling of the
    # (bz, 2*rep) output); use bag_tile = bz // 2 on v7x to feed both
    # TensorCores when the batch is large.

    # Wrapper-side fusions (plain XLA glue, done once per call).
    w_vu = jnp.concatenate([wv, wu], axis=1).astype(matmul_dtype)      # (fz, 2*fin)
    b_vu = jnp.concatenate([bv, bu], axis=1).astype(jnp.float32)       # (1, 2*fin)
    w_att = ww.reshape(1, fin).astype(jnp.float32)                     # (1, fin)
    w_proj = jnp.concatenate([wp1, wp2], axis=1).astype(matmul_dtype)  # (fz, 2*rep)

    n_tiles = bz // bag_tile
    z = pl.pallas_call(
        multirep_head_kernel,
        out_shape=jax.ShapeDtypeStruct((bz, 2 * rep), jnp.float32),
        grid=(n_tiles,),
        in_specs=[
            pl.BlockSpec((bag_tile, pz, fz), lambda b: (b, 0, 0)),   # x
            pl.BlockSpec((fz, 2 * fin), lambda b: (0, 0)),           # Wv|Wu
            pl.BlockSpec((1, 2 * fin), lambda b: (0, 0)),            # bv|bu
            pl.BlockSpec((1, fin), lambda b: (0, 0)),                # Ww row
            pl.BlockSpec((fz, 2 * rep), lambda b: (0, 0)),           # Wp1|Wp2
        ],
        out_specs=pl.BlockSpec((bag_tile, 2 * rep), lambda b: (b, 0)),
        compiler_params=pltpu.CompilerParams(
            dimension_semantics=("parallel",)),
    )(x, w_vu, b_vu, w_att, w_proj)

    return z[:, :rep], z[:, rep:]


def multirep_head_ref(x, wv, bv, wu, bu, ww, bw, wp1, wp2):
    """Pure-JAX reference mirroring the PyTorch forward (post-encoder)."""
    bz, pz, fz = x.shape
    xf = x.reshape(bz * pz, fz)
    att_v = jnp.tanh(xf @ wv + bv)
    att_u = jax.nn.sigmoid(xf @ wu + bu)
    att = (att_u * att_v) @ ww + bw
    weight = jax.nn.softmax(att.reshape(bz, pz, 1), axis=1)
    weight = weight.reshape(bz, 1, pz)
    rep = jnp.matmul(weight, x)[:, 0, :]          # torch.bmm(...).squeeze(1)
    p1 = rep @ wp1
    p2 = rep @ wp2
    n1 = p1 / jnp.maximum(jnp.linalg.norm(p1, axis=1, keepdims=True), 1e-12)
    n2 = p2 / jnp.maximum(jnp.linalg.norm(p2, axis=1, keepdims=True), 1e-12)
    return n1, n2


if __name__ == "__main__":
    # Small shapes consistent with the module (scaled-down defaults):
    # featureLength=32, MILLength=16, RepLength=16, batch=2 bags, 8 patches/bag.
    bz, pz = 2, 8
    feature_length, mil_length, rep_length = 32, 16, 16

    key = jax.random.PRNGKey(0)
    kx, kwv, kbv, kwu, kbu, kww, kbw, kp1, kp2 = jax.random.split(key, 9)

    x = jax.random.normal(kx, (bz, pz, feature_length), jnp.float32)

    # nn.Linear weights stored transposed: (in_features, out_features).
    wv = jax.random.normal(kwv, (feature_length, mil_length), jnp.float32) * 0.1
    bv = jax.random.normal(kbv, (1, mil_length), jnp.float32) * 0.1
    wu = jax.random.normal(kwu, (feature_length, mil_length), jnp.float32) * 0.1
    bu = jax.random.normal(kbu, (1, mil_length), jnp.float32) * 0.1
    ww = jax.random.normal(kww, (mil_length, 1), jnp.float32) * 0.1
    bw = jax.random.normal(kbw, (1, 1), jnp.float32) * 0.1
    wp1 = jax.random.normal(kp1, (feature_length, rep_length), jnp.float32) * 0.1
    wp2 = jax.random.normal(kp2, (feature_length, rep_length), jnp.float32) * 0.1

    z1, z2 = multirep_head(x, wv, bv, wu, bu, ww, bw, wp1, wp2)
    z1, z2 = jax.block_until_ready((z1, z2))

    r1, r2 = multirep_head_ref(x, wv, bv, wu, bu, ww, bw, wp1, wp2)
    assert z1.shape == (bz, rep_length) and z2.shape == (bz, rep_length)
    assert jnp.allclose(z1, r1, atol=1e-5, rtol=1e-4), "projection 1 mismatch"
    assert jnp.allclose(z2, r2, atol=1e-5, rtol=1e-4), "projection 2 mismatch"

    print("KERNEL_OK")
</pallas_src>

<mosaic_0001>
module attributes {stable_mosaic.version = 11 : i64} {
  func.func @multirep_head_kernel(%arg0: i32, %arg1: memref<2x8x32xf32, #tpu.memory_space<vmem>>, %arg2: memref<32x32xf32, #tpu.memory_space<vmem>>, %arg3: memref<1x32xf32, #tpu.memory_space<vmem>>, %arg4: memref<1x16xf32, #tpu.memory_space<vmem>>, %arg5: memref<32x32xf32, #tpu.memory_space<vmem>>, %arg6: memref<2x32xf32, #tpu.memory_space<vmem>>) attributes {dimension_semantics = [#tpu.dimension_semantics<parallel>], iteration_bounds = array<i64: 1>, scalar_prefetch = 0 : i64, scratch_operands = 0 : i64, tpu.core_type = #tpu.core_type<tc>, window_params = [{transform_indices = @transform_0, window_bounds = array<i64: 2, 8, 32>}, {pipeline_mode = #tpu.pipeline_mode<synchronous>, transform_indices = @transform_1, window_bounds = array<i64: 32, 32>}, {pipeline_mode = #tpu.pipeline_mode<synchronous>, transform_indices = @transform_2, window_bounds = array<i64: 1, 32>}, {pipeline_mode = #tpu.pipeline_mode<synchronous>, transform_indices = @transform_3, window_bounds = array<i64: 1, 16>}, {pipeline_mode = #tpu.pipeline_mode<synchronous>, transform_indices = @transform_4, window_bounds = array<i64: 32, 32>}, {transform_indices = @transform_5, window_bounds = array<i64: 2, 32>}]} {
    %c0 = arith.constant 0 : index
    %c0_0 = arith.constant 0 : index
    %c0_1 = arith.constant 0 : index
    %0 = vector.load %arg1[%c0, %c0_0, %c0_1] : memref<2x8x32xf32, #tpu.memory_space<vmem>>, vector<2x8x32xf32>
    %1 = vector.shape_cast %0 : vector<2x8x32xf32> to vector<16x32xf32>
    %c0_2 = arith.constant 0 : index
    %c0_3 = arith.constant 0 : index
    %2 = vector.load %arg2[%c0_2, %c0_3] : memref<32x32xf32, #tpu.memory_space<vmem>>, vector<32x32xf32>
    %cst = arith.constant dense<0.000000e+00> : vector<16x32xf32>
    %3 = tpu.matmul %1, %2, %cst {dimension_numbers = #tpu.dot_dimension_numbers<[1], [0], [0], [1], [0, 0, 1, 1], [], []>} : vector<16x32xf32>, vector<32x32xf32>, vector<16x32xf32> -> vector<16x32xf32>
    %c0_4 = arith.constant 0 : index
    %c0_5 = arith.constant 0 : index
    %4 = vector.load %arg3[%c0_4, %c0_5] : memref<1x32xf32, #tpu.memory_space<vmem>>, vector<1x32xf32>
    %5 = vector.broadcast %4 : vector<1x32xf32> to vector<16x32xf32>
    %6 = arith.addf %3, %5 : vector<16x32xf32>
    %7 = vector.extract_strided_slice %6 {offsets = [0, 0], sizes = [16, 16], strides = [1, 1]} : vector<16x32xf32> to vector<16x16xf32>
    %8 = math.tanh %7 : vector<16x16xf32>
    %9 = vector.extract_strided_slice %6 {offsets = [0, 16], sizes = [16, 16], strides = [1, 1]} : vector<16x32xf32> to vector<16x16xf32>
    %10 = arith.negf %9 : vector<16x16xf32>
    %11 = math.exp %10 : vector<16x16xf32>
    %cst_6 = arith.constant 1.000000e+00 : f32
    %12 = vector.broadcast %cst_6 : f32 to vector<16x16xf32>
    %13 = arith.addf %12, %11 : vector<16x16xf32>
    %14 = arith.divf %12, %13 : vector<16x16xf32>
    %15 = arith.mulf %14, %8 : vector<16x16xf32>
    %c0_7 = arith.constant 0 : index
    %c0_8 = arith.constant 0 : index
    %16 = vector.load %arg4[%c0_7, %c0_8] : memref<1x16xf32, #tpu.memory_space<vmem>>, vector<1x16xf32>
    %17 = vector.broadcast %16 : vector<1x16xf32> to vector<16x16xf32>
    %18 = arith.mulf %15, %17 : vector<16x16xf32>
    %19 = vector.shape_cast %18 : vector<16x16xf32> to vector<2x8x16xf32>
    %cst_9 = arith.constant dense<0.000000e+00> : vector<2x8xf32>
    %20 = vector.multi_reduction <add>, %19, %cst_9 [2] : vector<2x8x16xf32> to vector<2x8xf32>
    %21 = vector.shape_cast %20 : vector<2x8xf32> to vector<2x8x1xf32>
    %cst_10 = arith.constant dense<0xFF800000> : vector<2x1xf32>
    %22 = vector.multi_reduction <maximumf>, %21, %cst_10 [1] : vector<2x8x1xf32> to vector<2x1xf32>
    %23 = vector.shape_cast %22 : vector<2x1xf32> to vector<2x1x1xf32>
    %24 = vector.broadcast %23 : vector<2x1x1xf32> to vector<2x8x1xf32>
    %25 = arith.subf %21, %24 : vector<2x8x1xf32>
    %26 = math.exp %25 : vector<2x8x1xf32>
    %cst_11 = arith.constant dense<0.000000e+00> : vector<2x1xf32>
    %27 = vector.multi_reduction <add>, %26, %cst_11 [1] : vector<2x8x1xf32> to vector<2x1xf32>
    %28 = vector.shape_cast %27 : vector<2x1xf32> to vector<2x1x1xf32>
    %29 = tpu.reciprocal %28 : vector<2x1x1xf32> -> vector<2x1x1xf32>
    %30 = vector.broadcast %29 : vector<2x1x1xf32> to vector<2x8x1xf32>
    %31 = arith.mulf %26, %30 : vector<2x8x1xf32>
    %32 = vector.broadcast %31 : vector<2x8x1xf32> to vector<2x8x32xf32>
    %33 = arith.mulf %32, %0 : vector<2x8x32xf32>
    %cst_12 = arith.constant dense<0.000000e+00> : vector<2x32xf32>
    %34 = vector.multi_reduction <add>, %33, %cst_12 [1] : vector<2x8x32xf32> to vector<2x32xf32>
    %c0_13 = arith.constant 0 : index
    %c0_14 = arith.constant 0 : index
    %35 = vector.load %arg5[%c0_13, %c0_14] : memref<32x32xf32, #tpu.memory_space<vmem>>, vector<32x32xf32>
    %cst_15 = arith.constant dense<0.000000e+00> : vector<2x32xf32>
    %36 = tpu.matmul %34, %35, %cst_15 {dimension_numbers = #tpu.dot_dimension_numbers<[1], [0], [0], [1], [0, 0, 1, 1], [], []>} : vector<2x32xf32>, vector<32x32xf32>, vector<2x32xf32> -> vector<2x32xf32>
    %37 = vector.extract_strided_slice %36 {offsets = [0, 0], sizes = [2, 16], strides = [1, 1]} : vector<2x32xf32> to vector<2x16xf32>
    %38 = vector.extract_strided_slice %36 {offsets = [0, 16], sizes = [2, 16], strides = [1, 1]} : vector<2x32xf32> to vector<2x16xf32>
    %39 = arith.mulf %37, %37 : vector<2x16xf32>
    %cst_16 = arith.constant dense<0.000000e+00> : vector<2xf32>
    %40 = vector.multi_reduction <add>, %39, %cst_16 [1] : vector<2x16xf32> to vector<2xf32>
    %41 = vector.shape_cast %40 : vector<2xf32> to vector<2x1xf32>
    %42 = math.sqrt %41 : vector<2x1xf32>
    %cst_17 = arith.constant 9.99999996E-13 : f32
    %43 = vector.broadcast %cst_17 : f32 to vector<2x1xf32>
    %44 = arith.maximumf %42, %43 : vector<2x1xf32>
    %45 = tpu.reciprocal %44 : vector<2x1xf32> -> vector<2x1xf32>
    %46 = arith.mulf %38, %38 : vector<2x16xf32>
    %cst_18 = arith.constant dense<0.000000e+00> : vector<2xf32>
    %47 = vector.multi_reduction <add>, %46, %cst_18 [1] : vector<2x16xf32> to vector<2xf32>
    %48 = vector.shape_cast %47 : vector<2xf32> to vector<2x1xf32>
    %49 = math.sqrt %48 : vector<2x1xf32>
    %cst_19 = arith.constant 9.99999996E-13 : f32
    %50 = vector.broadcast %cst_19 : f32 to vector<2x1xf32>
    %51 = arith.maximumf %49, %50 : vector<2x1xf32>
    %52 = tpu.reciprocal %51 : vector<2x1xf32> -> vector<2x1xf32>
    %53 = vector.broadcast %45 : vector<2x1xf32> to vector<2x16xf32>
    %54 = arith.mulf %37, %53 : vector<2x16xf32>
    %55 = vector.broadcast %52 : vector<2x1xf32> to vector<2x16xf32>
    %56 = arith.mulf %38, %55 : vector<2x16xf32>
    %57 = tpu.concatenate %54, %56 in 1 : vector<2x16xf32>, vector<2x16xf32> -> vector<2x32xf32>
    %c0_20 = arith.constant 0 : index
    %c0_21 = arith.constant 0 : index
    %58 = vector.load %arg6[%c0_20, %c0_21] : memref<2x32xf32, #tpu.memory_space<vmem>>, vector<2x32xf32>
    tpu.vector_store %arg6[%c0_20, %c0_21], %57 {strides = array<i32>} : memref<2x32xf32, #tpu.memory_space<vmem>>, vector<2x32xf32>,
    return
  }
  func.func @transform_0(%arg0: i32) -> (i32, i32, i32) {
    %c0_i32 = arith.constant 0 : i32
    %c0_i32_0 = arith.constant 0 : i32
    %c0_i32_1 = arith.constant 0 : i32
    return %arg0, %c0_i32, %c0_i32_0 : i32, i32, i32
  }
  func.func @transform_1(%arg0: i32) -> (i32, i32) {
    %c0_i32 = arith.constant 0 : i32
    %c0_i32_0 = arith.constant 0 : i32
    %c0_i32_1 = arith.constant 0 : i32
    return %c0_i32, %c0_i32_0 : i32, i32
  }
  func.func @transform_2(%arg0: i32) -> (i32, i32) {
    %c0_i32 = arith.constant 0 : i32
    %c0_i32_0 = arith.constant 0 : i32
    %c0_i32_1 = arith.constant 0 : i32
    return %c0_i32, %c0_i32_0 : i32, i32
  }
  func.func @transform_3(%arg0: i32) -> (i32, i32) {
    %c0_i32 = arith.constant 0 : i32
    %c0_i32_0 = arith.constant 0 : i32
    %c0_i32_1 = arith.constant 0 : i32
    return %c0_i32, %c0_i32_0 : i32, i32
  }
  func.func @transform_4(%arg0: i32) -> (i32, i32) {
    %c0_i32 = arith.constant 0 : i32
    %c0_i32_0 = arith.constant 0 : i32
    %c0_i32_1 = arith.constant 0 : i32
    return %c0_i32, %c0_i32_0 : i32, i32
  }
  func.func @transform_5(%arg0: i32) -> (i32, i32) {
    %c0_i32 = arith.constant 0 : i32
    %c0_i32_0 = arith.constant 0 : i32
    return %arg0, %c0_i32 : i32, i32
  }
}

</mosaic_0001>

<llo_original>
// kernel: tpu_custom_call.1
$region0: #{tpu_custom_call.1}
  #allocation0 [shape = 'u32[]', space=smem, size = 0x4, offset = 0x4, fixed_abs, tag = 'smem constant byte address 0x4 - core index']
  #allocation1 [shape = 'u32[144,128]{1,0:T(1,128)}', space=vmem, size = 0x12000, scoped, tag = 'internal scratch']
  %s0 = inlined_call_operand.hbm [shape: f32[2,8,32], index: 0, kind: input, shape index: {}]
  %s1 = inlined_call_operand.hbm [shape: f32[32,32], index: 1, kind: input, shape index: {}]
  %s2 = inlined_call_operand.vmem [shape: f32[1,32], index: 2, kind: input, shape index: {}]
  %s3 = inlined_call_operand.vmem [shape: f32[1,16], index: 3, kind: input, shape index: {}]
  %s4 = inlined_call_operand.hbm [shape: f32[32,32], index: 4, kind: input, shape index: {}]
  %s5 = inlined_call_operand.hbm [shape: f32[2,32], index: 5, kind: output, shape index: {}]
  %s6 = sld [smem:[#allocation0]]
  $region42: #{tpu_custom_call.1} parent=0
    _
  %s8 = ssub.s32 1, %s6
  %s9 = scalar_select 0, %s8, %s6
  $region1: #{tpu_custom_call.1} parent=0
    #allocation2 [shape = 'u8[8192]{0}', space=vmem, size = 0x2000, scoped, tag = 'input window, operand 0, single buffered']
    #allocation3 [shape = 's32[1]{0}', space=sflag, size = 0x4, scoped, tag = 'scoped memory for tpu_custom_call.1']
    #allocation4 [shape = 's32[1]{0}', space=sflag, size = 0x4, scoped, tag = 'scoped memory for tpu_custom_call.1']
    #allocation5 [shape = 'u8[16384]{0}', space=vmem, size = 0x4000, scoped, tag = 'input window, operand 1, single buffered']
    #allocation6 [shape = 's32[1]{0}', space=sflag, size = 0x4, scoped, tag = 'scoped memory for tpu_custom_call.1']
    #allocation7 [shape = 'u8[16384]{0}', space=vmem, size = 0x4000, scoped, tag = 'input window, operand 4, single buffered']
    #allocation8 [shape = 'u8[1024]{0}', space=vmem, size = 0x400, scoped, tag = 'output window, operand 0, single buffered']
    %10 = vsyncpa [#allocation3], 0
    %11 = vsyncpa [#allocation6], 0
    %12 = vsyncpa [#allocation4], 0
    // Predicated region
    $region2: #{tpu_custom_call.1} parent=1 // pred_check
      _
    $region3: #{tpu_custom_call.1} parent=1 // pred_check_branch
      %14 = sbr.rel (0) target = $region5
    $region4: #{tpu_custom_call.1} parent=1 // pred_region
      %s16 = ssub.s32 256, 256
      %17 = vsyncadd [#allocation3], %s16
      %s18 = sshll.u32 [#allocation2], 4
      %s19 = int_to_ptr.vmem [resolvable:$true] %s18
      %24 = dma.hbm_to_vmem [thread:$0]  %s0, 256, %s19, [#allocation3], 128, 128, 8
    $region5: #{tpu_custom_call.1} parent=1 // pred_fallthru
      _
    // Predicated region
    $region6: #{tpu_custom_call.1} parent=1 // pred_check
      _
    $region7: #{tpu_custom_call.1} parent=1 // pred_check_branch
      %26 = sbr.rel (0) target = $region9
    $region8: #{tpu_custom_call.1} parent=1 // pred_region
      %s28 = ssub.s32 512, 512
      %29 = vsyncadd [#allocation6], %s28
      %s30 = sshll.u32 [#allocation5], 4
      %s31 = int_to_ptr.vmem [resolvable:$true] %s30
      %36 = dma.hbm_to_vmem [thread:$0]  %s1, 512, %s31, [#allocation6], 128, 128, 8
    $region9: #{tpu_custom_call.1} parent=1 // pred_fallthru
      _
    // Predicated region
    $region10: #{tpu_custom_call.1} parent=1 // pred_check
      _
    $region11: #{tpu_custom_call.1} parent=1 // pred_check_branch
      %38 = sbr.rel (0) target = $region13
    $region12: #{tpu_custom_call.1} parent=1 // pred_region
      _
    $region13: #{tpu_custom_call.1} parent=1 // pred_fallthru
      _
    // Predicated region
    $region14: #{tpu_custom_call.1} parent=1 // pred_check
      _
    $region15: #{tpu_custom_call.1} parent=1 // pred_check_branch
      %40 = sbr.rel (0) target = $region17
    $region16: #{tpu_custom_call.1} parent=1 // pred_region
      _
    $region17: #{tpu_custom_call.1} parent=1 // pred_fallthru
      _
    // Predicated region
    $region18: #{tpu_custom_call.1} parent=1 // pred_check
      _
    $region19: #{tpu_custom_call.1} parent=1 // pred_check_branch
      %42 = sbr.rel (0) target = $region21
    $region20: #{tpu_custom_call.1} parent=1 // pred_region
      %s44 = ssub.s32 512, 512
      %45 = vsyncadd [#allocation6], %s44
      %s46 = sshll.u32 [#allocation7], 4
      %s47 = int_to_ptr.vmem [resolvable:$true] %s46
      %52 = dma.hbm_to_vmem [thread:$0]  %s4, 512, %s47, [#allocation6], 128, 128, 8
    $region21: #{tpu_custom_call.1} parent=1 // pred_fallthru
      _
    // Predicated region
    $region22: #{tpu_custom_call.1} parent=1 // pred_check
      _
    $region23: #{tpu_custom_call.1} parent=1 // pred_check_branch
      %54 = sbr.rel (0) target = $region25
    $region24: #{tpu_custom_call.1} parent=1 // pred_region
      %55 = dma.done [#allocation3], 256
    $region25: #{tpu_custom_call.1} parent=1 // pred_fallthru
      _
    // Predicated region
    $region26: #{tpu_custom_call.1} parent=1 // pred_check
      _
    $region27: #{tpu_custom_call.1} parent=1 // pred_check_branch
      %57 = sbr.rel (0) target = $region29
    $region28: #{tpu_custom_call.1} parent=1 // pred_region
      %58 = dma.done [#allocation6], 512
    $region29: #{tpu_custom_call.1} parent=1 // pred_fallthru
      _
    // Predicated region
    $region30: #{tpu_custom_call.1} parent=1 // pred_check
      _
    $region31: #{tpu_custom_call.1} parent=1 // pred_check_branch
      %60 = sbr.rel (0) target = $region33
    $region32: #{tpu_custom_call.1} parent=1 // pred_region
      %61 = dma.done [#allocation6], 512
    $region33: #{tpu_custom_call.1} parent=1 // pred_fallthru
      _
    %v62 = vld [vmem:[#allocation2] sm:$0xff]
    %v63 = vld [vmem:[#allocation2 + $0x8] sm:$0xff]
    %v64 = vld [vmem:[#allocation5] sm:$0xff]
    %v65 = vld [vmem:[#allocation5 + $0x8] sm:$0xff]
    %v66 = vld [vmem:[#allocation5 + $0x10] sm:$0xff]
    %v67 = vld [vmem:[#allocation5 + $0x18] sm:$0xff]
    %v68 = vld [vmem:[%s2] sm:$0x1]
    %v70 = vlaneseq
    %v71 = vshrl.u32 %v70, 7
    %v72 = vsub.s32 0, %v71
    %v73 = vrot.slane %v68, %v72
    %vm75 = vcmask 261120
    %v77 = vsel %vm75, %v62, 0
    %v80 = vsel %vm75, %v63, 0
    %82 = vmatprep.subr.mxu0 0.0
    %83 = vmatpush1.msra.mxu0 %v64
    %84 = vmatprep.subr.mxu0 0.0
    %85 = vmatpush1.msra.mxu0 %v65
    %86 = vmatprep.subr.mxu0 0.0
    %87 = vmatpush1.msra.mxu0 %v66
    %88 = vmatprep.subr.mxu0 0.0
    %89 = vmatpush1.msra.mxu0 %v67
    %90 = vmatprep.subr.mxu0 0.0
    %91 = vmatpush1.msra.mxu0 0.0
    %92 = vmatprep.subr.mxu0 0.0
    %93 = vmatpush1.msra.mxu0 0.0
    %94 = vmatprep.subr.mxu0 0.0
    %95 = vmatpush1.msra.mxu0 0.0
    %96 = vmatprep.subr.mxu0 0.0
    %97 = vmatpush1.msra.mxu0 0.0
    %98 = vmatprep.subr.mxu0 0.0
    %99 = vmatpush1.msra.mxu0 0.0
    %100 = vmatprep.subr.mxu0 0.0
    %101 = vmatpush1.msra.mxu0 0.0
    %102 = vmatprep.subr.mxu0 0.0
    %103 = vmatpush1.msra.mxu0 0.0
    %104 = vmatprep.subr.mxu0 0.0
    %105 = vmatpush1.msra.mxu0 0.0
    %106 = vmatprep.subr.mxu0 0.0
    %107 = vmatpush1.msra.mxu0 0.0
    %108 = vmatprep.subr.mxu0 0.0
    %109 = vmatpush1.msra.mxu0 0.0
    %110 = vmatprep.subr.mxu0 0.0
    %111 = vmatpush1.msra.mxu0 0.0
    %112 = vmatprep.subr.mxu0 0.0
    %113 = vmatpush1.msra.mxu0 0.0
    %114 = vmatprep.subr.mxu0 0.0
    %115 = vmatpush1.msra.mxu0 0.0
    %116 = vmatprep.subr.mxu0 0.0
    %117 = vmatpush1.msra.mxu0 0.0
    %118 = vmatprep.subr.mxu0 0.0
    %119 = vmatpush1.msra.mxu0 0.0
    %120 = vmatprep.subr.mxu0 0.0
    %121 = vmatpush1.msra.mxu0 0.0
    %122 = vmatprep.subr.mxu0 0.0
    %123 = vmatpush1.msra.mxu0 0.0
    %124 = vmatprep.subr.mxu0 0.0
    %125 = vmatpush1.msra.mxu0 0.0
    %126 = vmatprep.subr.mxu0 0.0
    %127 = vmatpush1.msra.mxu0 0.0
    %128 = vmatprep.subr.mxu0 0.0
    %129 = vmatpush1.msra.mxu0 0.0
    %130 = vmatprep.subr.mxu0 0.0
    %131 = vmatpush1.msra.mxu0 0.0
    %132 = vmatprep.subr.mxu0 0.0
    %133 = vmatpush1.msra.mxu0 0.0
    %134 = vmatprep.subr.mxu0 0.0
    %135 = vmatpush1.msra.mxu0 0.0
    %136 = vmatprep.subr.mxu0 0.0
    %137 = vmatpush1.msra.mxu0 0.0
    %138 = vmatprep.subr.mxu0 0.0
    %139 = vmatpush1.msra.mxu0 0.0
    %140 = vmatprep.subr.mxu0 0.0
    %141 = vmatpush1.msra.mxu0 0.0
    %142 = vmatprep.subr.mxu0 0.0
    %143 = vmatpush1.msra.mxu0 0.0
    %144 = vmatprep.subr.mxu0 0.0
    %145 = vmatpush1.msra.mxu0 0.0
    %146 = vmatprep.mubr.f32.mxu0 0.0
    %147 = vmatmul.mubr.f32.gmra.mrb[0].mxu0 %v77
    %v148 = vpop.f32.mrb[0].mxu0
    %v149 = vadd.f32 %v73, %v148
    %v150 = vpop.f32.mrb[0].mxu0
    %151 = vmatprep.mubr.f32.mxu0 0.0
    %152 = vmatmul.mubr.f32.gmra.mrb[0].mxu0 %v80
    %v153 = vpop.f32.mrb[0].mxu0
    %v154 = vadd.f32 %v73, %v153
    %v155 = vpop.f32.mrb[0].mxu0
    %156 = vdwg.mxu0
    %v157 = vtanh.pop %v149
    %v158 = vtanh.pop %v154
    %v159 = vxor.u32 %v149, 2147483648
    %v160 = vxor.u32 %v154, 2147483648
    %v161 = vmul.f32 %v159, 1.442695
    %v162 = vpow.pop %v161
    %v163 = vmul.f32 %v160, 1.442695
    %v164 = vpow.pop %v163
    %v165 = vadd.f32 %v162, 1.0
    %v166 = vadd.f32 %v164, 1.0
    %v167 = vrcp.pop %v165
    %v168 = vmul.f32 1.0, %v167
    %v169 = vrcp.pop %v166
    %v170 = vmul.f32 1.0, %v169
    %173 = vrot.lane.b32.xlu0 %v157, 16
    %v174 = vpop.permute.xlu0 %173
    %175 = vrot.lane.b32.xlu0 %v158, 16
    %v176 = vpop.permute.xlu0 %175
    %v179 = vmul.f32 %v168, %v174
    %v180 = vmul.f32 %v170, %v176
    %v181 = vld [vmem:[%s3] sm:$0x1]
    %v183 = vlaneseq
    %v184 = vshrl.u32 %v183, 7
    %v185 = vsub.s32 0, %v184
    %v186 = vrot.slane %v181, %v185
    %187 = vrot.lane.b32.xlu0 %v186, 16
    %v188 = vpop.permute.xlu0 %187
    %v190 = vmul.f32 %v179, %v188
    %v191 = vmul.f32 %v180, %v188
    %194 = vrot.lane.b32.xlu0 %v190, 112
    %v195 = vpop.permute.xlu0 %194
    %196 = vrot.lane.b32.xlu0 %v191, 112
    %v197 = vpop.permute.xlu0 %196
    %vm200 = vcmask 130048
    %v201 = vsel %vm200, %v195, 0.0
    %202 = vadd.xlane.f32.xlu0 %v201
    %v203 = vpop.xlane.xlu0 %202
    %v204 = vsel %vm200, %v197, 0.0
    %205 = vadd.xlane.f32.xlu0 %v204
    %v206 = vpop.xlane.xlu0 %205
    %v207 = vrot.slane %v203, 4
    %v208 = vmax.f32 %v203, %v207
    %v209 = vrot.slane %v208, 2
    %v210 = vmax.f32 %v208, %v209
    %v211 = vrot.slane %v210, 1
    %v212 = vmax.f32 %v210, %v211
    %v213 = vrot.slane %v206, 4
    %v214 = vmax.f32 %v206, %v213
    %v215 = vrot.slane %v214, 2
    %v216 = vmax.f32 %v214, %v215
    %v217 = vrot.slane %v216, 1
    %v218 = vmax.f32 %v216, %v217
    %v219 = vsub.f32 %v203, %v212
    %v220 = vsub.f32 %v206, %v218
    %v221 = vmul.f32 %v219, 1.442695
    %v222 = vpow.pop %v221
    %v223 = vmul.f32 %v220, 1.442695
    %v224 = vpow.pop %v223
    %v225 = vrot.slane %v222, 4
    %v226 = vadd.f32 %v222, %v225
    %v227 = vrot.slane %v226, 2
    %v228 = vadd.f32 %v226, %v227
    %v229 = vrot.slane %v228, 1
    %v230 = vadd.f32 %v228, %v229
    %v231 = vrot.slane %v224, 4
    %v232 = vadd.f32 %v224, %v231
    %v233 = vrot.slane %v232, 2
    %v234 = vadd.f32 %v232, %v233
    %v235 = vrot.slane %v234, 1
    %v236 = vadd.f32 %v234, %v235
    %v237 = vrcp.pop %v230
    %v238 = vrcp.pop %v236
    %v239 = vmul.f32 %v222, %v237
    %v240 = vmul.f32 %v224, %v238
    %v241 = vmul.f32 %v239, %v62
    %v242 = vmul.f32 %v240, %v63
    %v243 = vsel %vm75, %v241, 0.0
    %v244 = vrot.slane %v243, 4
    %v245 = vadd.f32 %v243, %v244
    %v246 = vrot.slane %v245, 2
    %v247 = vadd.f32 %v245, %v246
    %v248 = vrot.slane %v247, 1
    %v249 = vadd.f32 %v247, %v248
    %v250 = vsel %vm75, %v242, 0.0
    %v251 = vrot.slane %v250, 4
    %v252 = vadd.f32 %v250, %v251
    %v253 = vrot.slane %v252, 2
    %v254 = vadd.f32 %v252, %v253
    %v255 = vrot.slane %v254, 1
    %v256 = vadd.f32 %v254, %v255
    %v257 = vld [vmem:[#allocation7] sm:$0xff]
    %v258 = vld [vmem:[#allocation7 + $0x8] sm:$0xff]
    %v259 = vld [vmem:[#allocation7 + $0x10] sm:$0xff]
    %v260 = vld [vmem:[#allocation7 + $0x18] sm:$0xff]
    %vm263 = vcmask 1041409
    %v264 = vsel %vm263, %v256, %v249
    %v265 = vsel %vm75, %v264, 0
    %267 = vmatprep.subr.mxu0 0.0
    %268 = vmatpush1.msra.mxu0 %v257
    %269 = vmatprep.subr.mxu0 0.0
    %270 = vmatpush1.msra.mxu0 %v258
    %271 = vmatprep.subr.mxu0 0.0
    %272 = vmatpush1.msra.mxu0 %v259
    %273 = vmatprep.subr.mxu0 0.0
    %274 = vmatpush1.msra.mxu0 %v260
    %275 = vmatprep.subr.mxu0 0.0
    %276 = vmatpush1.msra.mxu0 0.0
    %277 = vmatprep.subr.mxu0 0.0
    %278 = vmatpush1.msra.mxu0 0.0
    %279 = vmatprep.subr.mxu0 0.0
    %280 = vmatpush1.msra.mxu0 0.0
    %281 = vmatprep.subr.mxu0 0.0
    %282 = vmatpush1.msra.mxu0 0.0
    %283 = vmatprep.subr.mxu0 0.0
    %284 = vmatpush1.msra.mxu0 0.0
    %285 = vmatprep.subr.mxu0 0.0
    %286 = vmatpush1.msra.mxu0 0.0
    %287 = vmatprep.subr.mxu0 0.0
    %288 = vmatpush1.msra.mxu0 0.0
    %289 = vmatprep.subr.mxu0 0.0
    %290 = vmatpush1.msra.mxu0 0.0
    %291 = vmatprep.subr.mxu0 0.0
    %292 = vmatpush1.msra.mxu0 0.0
    %293 = vmatprep.subr.mxu0 0.0
    %294 = vmatpush1.msra.mxu0 0.0
    %295 = vmatprep.subr.mxu0 0.0
    %296 = vmatpush1.msra.mxu0 0.0
    %297 = vmatprep.subr.mxu0 0.0
    %298 = vmatpush1.msra.mxu0 0.0
    %299 = vmatprep.subr.mxu0 0.0
    %300 = vmatpush1.msra.mxu0 0.0
    %301 = vmatprep.subr.mxu0 0.0
    %302 = vmatpush1.msra.mxu0 0.0
    %303 = vmatprep.subr.mxu0 0.0
    %304 = vmatpush1.msra.mxu0 0.0
    %305 = vmatprep.subr.mxu0 0.0
    %306 = vmatpush1.msra.mxu0 0.0
    %307 = vmatprep.subr.mxu0 0.0
    %308 = vmatpush1.msra.mxu0 0.0
    %309 = vmatprep.subr.mxu0 0.0
    %310 = vmatpush1.msra.mxu0 0.0
    %311 = vmatprep.subr.mxu0 0.0
    %312 = vmatpush1.msra.mxu0 0.0
    %313 = vmatprep.subr.mxu0 0.0
    %314 = vmatpush1.msra.mxu0 0.0
    %315 = vmatprep.subr.mxu0 0.0
    %316 = vmatpush1.msra.mxu0 0.0
    %317 = vmatprep.subr.mxu0 0.0
    %318 = vmatpush1.msra.mxu0 0.0
    %319 = vmatprep.subr.mxu0 0.0
    %320 = vmatpush1.msra.mxu0 0.0
    %321 = vmatprep.subr.mxu0 0.0
    %322 = vmatpush1.msra.mxu0 0.0
    %323 = vmatprep.subr.mxu0 0.0
    %324 = vmatpush1.msra.mxu0 0.0
    %325 = vmatprep.subr.mxu0 0.0
    %326 = vmatpush1.msra.mxu0 0.0
    %327 = vmatprep.subr.mxu0 0.0
    %328 = vmatpush1.msra.mxu0 0.0
    %329 = vmatprep.subr.mxu0 0.0
    %330 = vmatpush1.msra.mxu0 0.0
    %331 = vmatprep.mubr.f32.mxu0 0.0
    %332 = vmatmul.mubr.f32.gmra.mrb[0].mxu0 %v265
    %v333 = vpop.f32.mrb[0].mxu0
    %v334 = vadd.f32 0.0, %v333
    %v335 = vpop.f32.mrb[0].mxu0
    %336 = vdwg.mxu0
    %v337 = vmul.f32 %v334, %v334
    %vm338 = vcmask 123904
    %v339 = vsel %vm338, %v337, 0.0
    %340 = vadd.xlane.f32.xlu0 %v339
    %v341 = vpop.xlane.xlu0 %340
    %v342 = vrsqrt.pop %v341
    %v343 = vmul.f32 %v341, %v342
    %vm344 = vcmp.eq.f32.partialorder %v341, inf
    %v345 = vsel %vm344, %v341, %v343
    %vm346 = vcmp.eq.f32.partialorder %v341, 0.0
    %v347 = vand.u32 %v341, 2147483648
    %v348 = vsel %vm346, %v347, %v345
    %v349 = vmax.f32 %v348, 1e-12
    %v350 = vrcp.pop %v349
    %352 = vrot.lane.b32.xlu0 %v337, 112
    %v353 = vpop.permute.xlu0 %352
    %v355 = vsel %vm338, %v353, 0.0
    %356 = vadd.xlane.f32.xlu0 %v355
    %v357 = vpop.xlane.xlu0 %356
    %v358 = vrsqrt.pop %v357
    %v359 = vmul.f32 %v357, %v358
    %vm360 = vcmp.eq.f32.partialorder %v357, inf
    %v361 = vsel %vm360, %v357, %v359
    %vm362 = vcmp.eq.f32.partialorder %v357, 0.0
    %v363 = vand.u32 %v357, 2147483648
    %v364 = vsel %vm362, %v363, %v361
    %v365 = vmax.f32 %v364, 1e-12
    %v366 = vrcp.pop %v365
    %v367 = vmul.f32 %v334, %v350
    %v368 = vmul.f32 %v334, %v366
    %v369 = vsel %vm200, %v367, %v368
    %vm370 = vcmask 254976
    %371 = vst.msk [vmem:[#allocation8] sm:$0x3] %vm370, %v369
    // Predicated region
    $region34: #{tpu_custom_call.1} parent=1 // pred_check
      _
    $region35: #{tpu_custom_call.1} parent=1 // pred_check_branch
      %373 = sbr.rel (0) target = $region37
    $region36: #{tpu_custom_call.1} parent=1 // pred_region
      %s375 = ssub.s32 32, 32
      %376 = vsyncadd [#allocation4], %s375
      %s378 = sshll.u32 [#allocation8], 4
      %s379 = int_to_ptr.vmem [resolvable:$true] %s378
      %381 = dma.vmem_to_hbm [thread:$0]  %s379, 32, %s5, [#allocation4]
    $region37: #{tpu_custom_call.1} parent=1 // pred_fallthru
      _
    // Predicated region
    $region38: #{tpu_custom_call.1} parent=1 // pred_check
      _
    $region39: #{tpu_custom_call.1} parent=1 // pred_check_branch
      %383 = sbr.rel (0) target = $region41
    $region40: #{tpu_custom_call.1} parent=1 // pred_region
      %384 = dma.done [#allocation4], 32
    $region41: #{tpu_custom_call.1} parent=1 // pred_fallthru
      _
    %385 = vsyncpa [#allocation3], 1
    %386 = vsyncpa [#allocation6], 1
    %387 = vsyncpa [#allocation4], 1

</llo_original>
